<compile_context>
chip_gen: v7x
topology: tpu7x:2x2x1
jax: 0.10.0
libtpu: 0.0.40
codegen_flags: <defaults>
</compile_context>

<pallas_src>
import numpy as np
import jax
import jax.numpy as jnp
from jax.experimental import pallas as pl
from jax.experimental.pallas import tpu as pltpu


# ----------------------------------------------------------------------------
# Small helpers
# ----------------------------------------------------------------------------
def _round_up(x, m):
    return ((x + m - 1) // m) * m


def _cdiv(a, b):
    return -(-a // b)


def _adaptive_pool_matrix(in_size, out_size):
    """Averaging matrix [out_size, in_size] matching torch.nn.AdaptiveAvgPool bins:
    start = floor(i*L/O), end = ceil((i+1)*L/O)."""
    m = np.zeros((out_size, in_size), dtype=np.float32)
    for i in range(out_size):
        start = (i * in_size) // out_size
        end = -(-((i + 1) * in_size) // out_size)  # ceil division
        m[i, start:end] = 1.0 / (end - start)
    return m


def init_params(key, Ns, Nb, E, H, W):
    """Deterministic synthetic parameters (shapes follow SidechainDecoder.__init__,
    arch_type=1, mlp_depth=2, hidden=128)."""
    pool_dim = H * W
    final_in = Nb * 3 + pool_dim + 128  # arch_type == 1
    ks = jax.random.split(key, 3)

    def lin(k, i, o, scale=0.05):
        kw, kb = jax.random.split(k)
        w = jax.random.normal(kw, (i, o), jnp.float32) * scale
        b = jax.random.normal(kb, (1, o), jnp.float32) * 0.01
        return w, b

    wz, bz = lin(ks[0], Ns * E, 128)          # sc_zref_reduce
    w1, b1 = lin(ks[1], final_in, 128)        # mlp_sidechain layer 1
    w2, b2 = lin(ks[2], 128, Ns * 3)          # mlp_sidechain layer 2

    # Split layer-1 weight into the concat pieces [bb_flat | pooled_flat | zref_reduced]
    w1bb = w1[: Nb * 3]
    w1pool = w1[Nb * 3: Nb * 3 + pool_dim].reshape(H, W, 128)
    w1z = w1[Nb * 3 + pool_dim:]

    return dict(
        prow=jnp.asarray(_adaptive_pool_matrix(Ns, H)),       # [H, Ns]
        pcol=jnp.asarray(_adaptive_pool_matrix(E, W).T),       # [E, W]
        wz=wz, bz=bz,
        w1bb=w1bb, w1pool=w1pool, w1z=w1z, b1=b1,
        gamma=jnp.ones((1, 128), jnp.float32),                 # LayerNorm(128) defaults
        beta=jnp.zeros((1, 128), jnp.float32),
        w2=w2, b2=b2,
    )


# ----------------------------------------------------------------------------
# One-time parameter fusion / padding / dtype prep (cache and reuse per model)
# ----------------------------------------------------------------------------
def prepare_decoder(params, z_ref, num_total_atoms, sidechain_indices,
                    backbone_indices, emb_dim, pooling_dim):
    """Fold pooling, the sidechain gather and the batch-invariant zref branch
    into static weights; cast MXU operands to bf16; pad the output lanes."""
    p = params
    E = emb_dim
    N = num_total_atoms
    Ns = len(sidechain_indices)
    Nb = len(backbone_indices)
    H, W = pooling_dim

    sc_idx = jnp.asarray(sidechain_indices, jnp.int32)
    bb_idx = jnp.asarray(backbone_indices, jnp.int32)

    # -- batch-invariant zref branch -> folded into the layer-1 bias ---------
    z_flat = z_ref[sc_idx].reshape(1, Ns * E)
    zred = z_flat @ p['wz'] + p['bz']                            # [1, 128]
    b1_eff = p['b1'] + zred @ p['w1z']                           # [1, 128]

    # -- adaptive pooling folded into the layer-1 weight (exact rewrite) -----
    w_pool_eff = jnp.einsum('hn,ew,hwc->nec', p['prow'], p['pcol'],
                            p['w1pool']).reshape(Ns * E, 128)    # [Ns*E, 128]

    # -- sidechain gather folded into the weight: scatter pooled rows into a
    #    [N*E, 128] weight whose non-sidechain rows are zero.  The kernel can
    #    then consume hno_latent directly (no HBM gather round trip).
    row_idx = (sc_idx[:, None] * E + jnp.arange(E, dtype=jnp.int32)[None, :]).reshape(-1)
    w1_hno = jnp.zeros((N * E, 128), jnp.float32).at[row_idx].set(w_pool_eff)

    # -- lane-dense output padding -------------------------------------------
    n_out = Ns * 3
    n_out_pad = _round_up(n_out, 128)
    w2p = jnp.pad(p['w2'], ((0, 0), (0, n_out_pad - n_out)))     # [128, Nout_pad]
    b2p = jnp.pad(p['b2'], ((0, 0), (0, n_out_pad - n_out)))     # [1, Nout_pad]

    vecs = jnp.concatenate([b1_eff, p['gamma'], p['beta']], axis=0)  # [3, 128] f32

    return dict(
        w1_hno=w1_hno.astype(jnp.bfloat16),                      # [N*E, 128]
        w1_bb=p['w1bb'].astype(jnp.bfloat16),                    # [Nb*3, 128]
        vecs=vecs,                                               # [3, 128] f32
        w2=w2p.astype(jnp.bfloat16),                             # [128, Nout_pad]
        b2=b2p,                                                  # [1, Nout_pad] f32
        sc_idx=sc_idx, bb_idx=bb_idx,
        num_total_atoms=N, emb_dim=E, Ns=Ns, Nb=Nb,
        n_out=n_out, n_out_pad=n_out_pad,
    )


# ----------------------------------------------------------------------------
# Pallas kernel: one grid step == one TILE_B row block of the batch
# ----------------------------------------------------------------------------
def _sidechain_kernel(hno_ref,    # [TB, N*E]   f32 (latents, gather folded into w1_hno)
                      bb_ref,     # [TB, Nb*3]  f32 (flat backbone coords)
                      w1h_ref,    # [N*E, 128]  bf16
                      w1b_ref,    # [Nb*3, 128] bf16
                      vecs_ref,   # [3, 128]    f32 rows: b1_eff, gamma, beta
                      w2_ref,     # [128, Nout_pad] bf16
                      b2_ref,     # [1, Nout_pad]   f32
                      out_ref):   # [TB, Nout_pad]  f32
    # Layer 1: two accumulated bf16 MXU matmuls (pooling / gather / zref branch
    # already folded into the weights & bias), f32 accumulation.
    h = jnp.dot(hno_ref[...].astype(jnp.bfloat16), w1h_ref[...],
                preferred_element_type=jnp.float32)
    h = h + jnp.dot(bb_ref[...].astype(jnp.bfloat16), w1b_ref[...],
                    preferred_element_type=jnp.float32)
    h = h + vecs_ref[0:1, :]                       # b1 + zref-branch contribution

    # ReLU
    h = jnp.maximum(h, 0.0)

    # LayerNorm(128): eps=1e-5, biased variance (PyTorch default), affine. All f32.
    mean = jnp.mean(h, axis=-1, keepdims=True)
    var = jnp.mean((h - mean) ** 2, axis=-1, keepdims=True)
    h = (h - mean) * jax.lax.rsqrt(var + 1e-5)
    h = h * vecs_ref[1:2, :] + vecs_ref[2:3, :]

    # Layer 2: Linear(128 -> Nout_pad), bf16 MXU, lane-dense f32 store.
    out_ref[...] = jnp.dot(h.astype(jnp.bfloat16), w2_ref[...],
                           preferred_element_type=jnp.float32) + b2_ref[...]


# ----------------------------------------------------------------------------
# Batch-tile selection (VMEM-driven, megacore-aware)
# ----------------------------------------------------------------------------
def _choose_tile_b(B, k_hno, k_bb, n_out_pad, weight_vmem_bytes,
                   tile_b_cap=256, vmem_block_budget=20 * 1024 * 1024):
    # Double-buffered f32 input blocks + double-buffered f32 output block.
    per_row = 2 * 4 * (k_hno + k_bb) + 2 * 4 * n_out_pad
    avail = max(per_row * 8, vmem_block_budget - weight_vmem_bytes)
    tb_vmem = max(8, (int(avail // per_row) // 8) * 8)
    tb = min(tile_b_cap, _round_up(B, 8), tb_vmem)
    # v7x has 2 TensorCores: keep >= 2 grid steps when the batch can be split.
    if B > 8 and _cdiv(B, tb) < 2:
        tb = max(8, _round_up(_cdiv(B, 2), 8))
    return tb


# ----------------------------------------------------------------------------
# Forward wrapper (glue: reshape / padding / scatter stay in plain JAX)
# ----------------------------------------------------------------------------
def sidechain_decoder_forward(hno_latent, predicted_backbone, prepared, tile_b=256):
    N = prepared['num_total_atoms']
    E = prepared['emb_dim']
    Ns = prepared['Ns']
    Nb = prepared['Nb']
    n_out = prepared['n_out']
    n_out_pad = prepared['n_out_pad']
    B = hno_latent.shape[0] // N

    k_hno = N * E
    k_bb = Nb * 3

    # Free reshapes (contiguous views) -- no HBM materialization.
    hno_2d = hno_latent.reshape(B, k_hno).astype(jnp.float32)
    bb_2d = predicted_backbone.reshape(B, k_bb).astype(jnp.float32)

    # Weight VMEM footprint (double-buffered by default).
    weight_vmem = 2 * (prepared['w1_hno'].size * 2 + prepared['w1_bb'].size * 2 +
                       prepared['w2'].size * 2 + prepared['vecs'].size * 4 +
                       prepared['b2'].size * 4)

    tb = _choose_tile_b(B, k_hno, k_bb, n_out_pad, weight_vmem, tile_b_cap=tile_b)
    num_tiles = _cdiv(B, tb)
    b_pad = num_tiles * tb
    if b_pad != B:
        hno_2d = jnp.pad(hno_2d, ((0, b_pad - B), (0, 0)))
        bb_2d = jnp.pad(bb_2d, ((0, b_pad - B), (0, 0)))

    flops = 2 * b_pad * (k_hno * 128 + k_bb * 128 + 128 * n_out_pad)
    bytes_accessed = (4 * b_pad * (k_hno + k_bb + n_out_pad) +
                      2 * (k_hno + k_bb + n_out_pad) * 128 + 4 * (3 * 128 + n_out_pad))
    cost = pl.CostEstimate(flops=int(flops), transcendentals=int(b_pad),
                           bytes_accessed=int(bytes_accessed))

    out_padded = pl.pallas_call(
        _sidechain_kernel,
        out_shape=jax.ShapeDtypeStruct((b_pad, n_out_pad), jnp.float32),
        grid=(num_tiles,),
        in_specs=[
            pl.BlockSpec((tb, k_hno), lambda i: (i, 0)),          # latents (batched)
            pl.BlockSpec((tb, k_bb), lambda i: (i, 0)),           # backbone (batched)
            pl.BlockSpec((k_hno, 128), lambda i: (0, 0)),         # fused W1 (hno part)
            pl.BlockSpec((k_bb, 128), lambda i: (0, 0)),          # W1 (backbone part)
            pl.BlockSpec((3, 128), lambda i: (0, 0)),             # b1_eff/gamma/beta
            pl.BlockSpec((128, n_out_pad), lambda i: (0, 0)),     # W2 (lane padded)
            pl.BlockSpec((1, n_out_pad), lambda i: (0, 0)),       # b2 (lane padded)
        ],
        out_specs=pl.BlockSpec((tb, n_out_pad), lambda i: (i, 0)),
        compiler_params=pltpu.CompilerParams(
            dimension_semantics=("parallel",),
            vmem_limit_bytes=48 * 1024 * 1024,
        ),
        cost_estimate=cost,
    )(hno_2d, bb_2d, prepared['w1_hno'], prepared['w1_bb'],
      prepared['vecs'], prepared['w2'], prepared['b2'])

    out_flat = out_padded[:B, :n_out]                             # strip padding
    pred_sidechain = out_flat.reshape(B, Ns, 3)
    full_coords = jnp.zeros((B, N, 3), jnp.float32)
    full_coords = full_coords.at[:, prepared['bb_idx'], :].set(
        predicted_backbone.astype(jnp.float32))
    full_coords = full_coords.at[:, prepared['sc_idx'], :].set(pred_sidechain)
    return full_coords


# ----------------------------------------------------------------------------
# Pure-JAX reference (mirrors the PyTorch forward, arch_type=1) for checking
# ----------------------------------------------------------------------------
def reference_forward(hno_latent, predicted_backbone, z_ref, p,
                      num_total_atoms, sidechain_indices, backbone_indices, pooling_dim):
    E = hno_latent.shape[1]
    B = hno_latent.shape[0] // num_total_atoms
    Ns = len(sidechain_indices)
    Nb = len(backbone_indices)
    H, W = pooling_dim
    sc_idx = jnp.asarray(sidechain_indices)
    bb_idx = jnp.asarray(backbone_indices)

    x = hno_latent.reshape(B, num_total_atoms, E)
    sc_emb = x[:, sc_idx, :]
    pooled = jnp.einsum('hn,bne,ew->bhw', p['prow'], sc_emb, p['pcol']).reshape(B, H * W)
    bb_flat = predicted_backbone.reshape(B, Nb * 3)
    zflat = jnp.broadcast_to(z_ref[sc_idx], (B, Ns, E)).reshape(B, Ns * E)
    zred = zflat @ p['wz'] + p['bz']
    w1 = jnp.concatenate([p['w1bb'], p['w1pool'].reshape(H * W, 128), p['w1z']], axis=0)
    fin = jnp.concatenate([bb_flat, pooled, zred], axis=-1)
    h = jnp.maximum(fin @ w1 + p['b1'], 0.0)
    mean = h.mean(-1, keepdims=True)
    var = ((h - mean) ** 2).mean(-1, keepdims=True)
    h = (h - mean) / jnp.sqrt(var + 1e-5) * p['gamma'] + p['beta']
    out = h @ p['w2'] + p['b2']
    pred_sc = out.reshape(B, Ns, 3)
    full = jnp.zeros((B, num_total_atoms, 3), jnp.float32)
    full = full.at[:, bb_idx, :].set(predicted_backbone)
    full = full.at[:, sc_idx, :].set(pred_sc)
    return full


# ----------------------------------------------------------------------------
if __name__ == "__main__":
    B = 2
    num_total_atoms = 24
    E = 8
    pooling_dim = (4, 2)
    backbone_indices = list(range(0, num_total_atoms, 3))                  # 8 atoms
    sidechain_indices = [i for i in range(num_total_atoms) if i % 3 != 0]  # 16 atoms

    key = jax.random.PRNGKey(0)
    k1, k2, k3, kp = jax.random.split(key, 4)
    hno_latent = jax.random.normal(k1, (B * num_total_atoms, E), jnp.float32)
    predicted_backbone = jax.random.normal(
        k2, (B, len(backbone_indices), 3), jnp.float32)
    z_ref = jax.random.normal(k3, (num_total_atoms, E), jnp.float32)

    params = init_params(kp, len(sidechain_indices), len(backbone_indices),
                         E, pooling_dim[0], pooling_dim[1])

    # One-time fusion / bf16 / padding prep (cache this per model in real use).
    prepared = prepare_decoder(params, z_ref, num_total_atoms, sidechain_indices,
                               backbone_indices, E, pooling_dim)
    prepared = jax.tree_util.tree_map(
        lambda a: jax.block_until_ready(a) if isinstance(a, jax.Array) else a, prepared)

    out = sidechain_decoder_forward(hno_latent, predicted_backbone, prepared)
    out = jax.block_until_ready(out)

    ref = reference_forward(hno_latent, predicted_backbone, z_ref, params,
                            num_total_atoms, sidechain_indices,
                            backbone_indices, pooling_dim)
    ref = jax.block_until_ready(ref)

    assert out.shape == (B, num_total_atoms, 3)
    # bf16 MXU operands -> tolerance loosened vs the pure-f32 reference.
    np.testing.assert_allclose(np.asarray(out), np.asarray(ref), rtol=2e-2, atol=2e-2)
    print("KERNEL_OK")
</pallas_src>

<mosaic_0001>
module attributes {stable_mosaic.version = 11 : i64} {
  func.func @_sidechain_kernel(%arg0: i32, %arg1: memref<8x192xf32, #tpu.memory_space<vmem>>, %arg2: memref<8x24xf32, #tpu.memory_space<vmem>>, %arg3: memref<192x128xbf16, #tpu.memory_space<vmem>>, %arg4: memref<24x128xbf16, #tpu.memory_space<vmem>>, %arg5: memref<3x128xf32, #tpu.memory_space<vmem>>, %arg6: memref<128x128xbf16, #tpu.memory_space<vmem>>, %arg7: memref<1x128xf32, #tpu.memory_space<vmem>>, %arg8: memref<8x128xf32, #tpu.memory_space<vmem>>) attributes {dimension_semantics = [#tpu.dimension_semantics<parallel>], iteration_bounds = array<i64: 1>, scalar_prefetch = 0 : i64, scratch_operands = 0 : i64, tpu.core_type = #tpu.core_type<tc>, window_params = [{transform_indices = @transform_0, window_bounds = array<i64: 8, 192>}, {transform_indices = @transform_1, window_bounds = array<i64: 8, 24>}, {pipeline_mode = #tpu.pipeline_mode<synchronous>, transform_indices = @transform_2, window_bounds = array<i64: 192, 128>}, {pipeline_mode = #tpu.pipeline_mode<synchronous>, transform_indices = @transform_3, window_bounds = array<i64: 24, 128>}, {pipeline_mode = #tpu.pipeline_mode<synchronous>, transform_indices = @transform_4, window_bounds = array<i64: 3, 128>}, {pipeline_mode = #tpu.pipeline_mode<synchronous>, transform_indices = @transform_5, window_bounds = array<i64: 128, 128>}, {pipeline_mode = #tpu.pipeline_mode<synchronous>, transform_indices = @transform_6, window_bounds = array<i64: 1, 128>}, {transform_indices = @transform_7, window_bounds = array<i64: 8, 128>}]} {
    %c0 = arith.constant 0 : index
    %c0_0 = arith.constant 0 : index
    %0 = vector.load %arg1[%c0, %c0_0] : memref<8x192xf32, #tpu.memory_space<vmem>>, vector<8x192xf32>
    %1 = arith.truncf %0 : vector<8x192xf32> to vector<8x192xbf16>
    %c0_1 = arith.constant 0 : index
    %c0_2 = arith.constant 0 : index
    %2 = vector.load %arg3[%c0_1, %c0_2] : memref<192x128xbf16, #tpu.memory_space<vmem>>, vector<192x128xbf16>
    %cst = arith.constant dense<0.000000e+00> : vector<8x128xf32>
    %3 = tpu.matmul %1, %2, %cst {dimension_numbers = #tpu.dot_dimension_numbers<[1], [0], [0], [1], [0, 0, 1, 1], [], []>} : vector<8x192xbf16>, vector<192x128xbf16>, vector<8x128xf32> -> vector<8x128xf32>
    %c0_3 = arith.constant 0 : index
    %c0_4 = arith.constant 0 : index
    %4 = vector.load %arg2[%c0_3, %c0_4] : memref<8x24xf32, #tpu.memory_space<vmem>>, vector<8x24xf32>
    %5 = arith.truncf %4 : vector<8x24xf32> to vector<8x24xbf16>
    %c0_5 = arith.constant 0 : index
    %c0_6 = arith.constant 0 : index
    %6 = vector.load %arg4[%c0_5, %c0_6] : memref<24x128xbf16, #tpu.memory_space<vmem>>, vector<24x128xbf16>
    %cst_7 = arith.constant dense<0.000000e+00> : vector<8x128xf32>
    %7 = tpu.matmul %5, %6, %cst_7 {dimension_numbers = #tpu.dot_dimension_numbers<[1], [0], [0], [1], [0, 0, 1, 1], [], []>} : vector<8x24xbf16>, vector<24x128xbf16>, vector<8x128xf32> -> vector<8x128xf32>
    %8 = arith.addf %3, %7 : vector<8x128xf32>
    %c0_8 = arith.constant 0 : index
    %c0_9 = arith.constant 0 : index
    %9 = vector.load %arg5[%c0_8, %c0_9] : memref<3x128xf32, #tpu.memory_space<vmem>>, vector<1x128xf32>
    %10 = vector.broadcast %9 : vector<1x128xf32> to vector<8x128xf32>
    %11 = arith.addf %8, %10 : vector<8x128xf32>
    %cst_10 = arith.constant 0.000000e+00 : f32
    %12 = vector.broadcast %cst_10 : f32 to vector<8x128xf32>
    %13 = arith.maximumf %11, %12 : vector<8x128xf32>
    %cst_11 = arith.constant dense<0.000000e+00> : vector<8xf32>
    %14 = vector.multi_reduction <add>, %13, %cst_11 [1] : vector<8x128xf32> to vector<8xf32>
    %15 = vector.shape_cast %14 : vector<8xf32> to vector<8x1xf32>
    %cst_12 = arith.constant 1.280000e+02 : f32
    %16 = vector.broadcast %cst_12 : f32 to vector<8x1xf32>
    %17 = arith.divf %15, %16 : vector<8x1xf32>
    %18 = vector.broadcast %17 : vector<8x1xf32> to vector<8x128xf32>
    %19 = arith.subf %13, %18 : vector<8x128xf32>
    %20 = arith.mulf %19, %19 : vector<8x128xf32>
    %cst_13 = arith.constant dense<0.000000e+00> : vector<8xf32>
    %21 = vector.multi_reduction <add>, %20, %cst_13 [1] : vector<8x128xf32> to vector<8xf32>
    %22 = vector.shape_cast %21 : vector<8xf32> to vector<8x1xf32>
    %cst_14 = arith.constant 1.280000e+02 : f32
    %23 = vector.broadcast %cst_14 : f32 to vector<8x1xf32>
    %24 = arith.divf %22, %23 : vector<8x1xf32>
    %25 = vector.broadcast %17 : vector<8x1xf32> to vector<8x128xf32>
    %26 = arith.subf %13, %25 : vector<8x128xf32>
    %cst_15 = arith.constant 9.99999974E-6 : f32
    %27 = vector.broadcast %cst_15 : f32 to vector<8x1xf32>
    %28 = arith.addf %24, %27 : vector<8x1xf32>
    %29 = math.rsqrt %28 : vector<8x1xf32>
    %30 = vector.broadcast %29 : vector<8x1xf32> to vector<8x128xf32>
    %31 = arith.mulf %26, %30 : vector<8x128xf32>
    %c1 = arith.constant 1 : index
    %c0_16 = arith.constant 0 : index
    %32 = vector.load %arg5[%c1, %c0_16] : memref<3x128xf32, #tpu.memory_space<vmem>>, vector<1x128xf32>
    %33 = vector.broadcast %32 : vector<1x128xf32> to vector<8x128xf32>
    %34 = arith.mulf %31, %33 : vector<8x128xf32>
    %c2 = arith.constant 2 : index
    %c0_17 = arith.constant 0 : index
    %35 = vector.load %arg5[%c2, %c0_17] : memref<3x128xf32, #tpu.memory_space<vmem>>, vector<1x128xf32>
    %36 = vector.broadcast %35 : vector<1x128xf32> to vector<8x128xf32>
    %37 = arith.addf %34, %36 : vector<8x128xf32>
    %38 = arith.truncf %37 : vector<8x128xf32> to vector<8x128xbf16>
    %c0_18 = arith.constant 0 : index
    %c0_19 = arith.constant 0 : index
    %39 = vector.load %arg6[%c0_18, %c0_19] : memref<128x128xbf16, #tpu.memory_space<vmem>>, vector<128x128xbf16>
    %cst_20 = arith.constant dense<0.000000e+00> : vector<8x128xf32>
    %40 = tpu.matmul %38, %39, %cst_20 {dimension_numbers = #tpu.dot_dimension_numbers<[1], [0], [0], [1], [0, 0, 1, 1], [], []>} : vector<8x128xbf16>, vector<128x128xbf16>, vector<8x128xf32> -> vector<8x128xf32>
    %c0_21 = arith.constant 0 : index
    %c0_22 = arith.constant 0 : index
    %41 = vector.load %arg7[%c0_21, %c0_22] : memref<1x128xf32, #tpu.memory_space<vmem>>, vector<1x128xf32>
    %42 = vector.broadcast %41 : vector<1x128xf32> to vector<8x128xf32>
    %43 = arith.addf %40, %42 : vector<8x128xf32>
    %c0_23 = arith.constant 0 : index
    %c0_24 = arith.constant 0 : index
    %44 = vector.load %arg8[%c0_23, %c0_24] : memref<8x128xf32, #tpu.memory_space<vmem>>, vector<8x128xf32>
    tpu.vector_store %arg8[%c0_23, %c0_24], %43 {strides = array<i32>} : memref<8x128xf32, #tpu.memory_space<vmem>>, vector<8x128xf32>,
    return
  }
  func.func @transform_0(%arg0: i32) -> (i32, i32) {
    %c0_i32 = arith.constant 0 : i32
    %c0_i32_0 = arith.constant 0 : i32
    return %arg0, %c0_i32 : i32, i32
  }
  func.func @transform_1(%arg0: i32) -> (i32, i32) {
    %c0_i32 = arith.constant 0 : i32
    %c0_i32_0 = arith.constant 0 : i32
    return %arg0, %c0_i32 : i32, i32
  }
  func.func @transform_2(%arg0: i32) -> (i32, i32) {
    %c0_i32 = arith.constant 0 : i32
    %c0_i32_0 = arith.constant 0 : i32
    %c0_i32_1 = arith.constant 0 : i32
    return %c0_i32, %c0_i32_0 : i32, i32
  }
  func.func @transform_3(%arg0: i32) -> (i32, i32) {
    %c0_i32 = arith.constant 0 : i32
    %c0_i32_0 = arith.constant 0 : i32
    %c0_i32_1 = arith.constant 0 : i32
    return %c0_i32, %c0_i32_0 : i32, i32
  }
  func.func @transform_4(%arg0: i32) -> (i32, i32) {
    %c0_i32 = arith.constant 0 : i32
    %c0_i32_0 = arith.constant 0 : i32
    %c0_i32_1 = arith.constant 0 : i32
    return %c0_i32, %c0_i32_0 : i32, i32
  }
  func.func @transform_5(%arg0: i32) -> (i32, i32) {
    %c0_i32 = arith.constant 0 : i32
    %c0_i32_0 = arith.constant 0 : i32
    %c0_i32_1 = arith.constant 0 : i32
    return %c0_i32, %c0_i32_0 : i32, i32
  }
  func.func @transform_6(%arg0: i32) -> (i32, i32) {
    %c0_i32 = arith.constant 0 : i32
    %c0_i32_0 = arith.constant 0 : i32
    %c0_i32_1 = arith.constant 0 : i32
    return %c0_i32, %c0_i32_0 : i32, i32
  }
  func.func @transform_7(%arg0: i32) -> (i32, i32) {
    %c0_i32 = arith.constant 0 : i32
    %c0_i32_0 = arith.constant 0 : i32
    return %arg0, %c0_i32 : i32, i32
  }
}

</mosaic_0001>

<llo_original>
// kernel: tpu_custom_call.1
$region0: #{tpu_custom_call.1}
  #allocation0 [shape = 'u32[]', space=smem, size = 0x4, offset = 0x4, fixed_abs, tag = 'smem constant byte address 0x4 - core index']
  #allocation1 [shape = 'u32[144,128]{1,0:T(1,128)}', space=vmem, size = 0x12000, scoped, tag = 'internal scratch']
  %s0 = inlined_call_operand.hbm [shape: f32[8,192], index: 0, kind: input, shape index: {}]
  %s1 = inlined_call_operand.hbm [shape: f32[8,24], index: 1, kind: input, shape index: {}]
  %s2 = inlined_call_operand.hbm [shape: bf16[192,128], index: 2, kind: input, shape index: {}]
  %s3 = inlined_call_operand.hbm [shape: bf16[24,128], index: 3, kind: input, shape index: {}]
  %s4 = inlined_call_operand.vmem [shape: f32[3,128], index: 4, kind: input, shape index: {}]
  %s5 = inlined_call_operand.hbm [shape: bf16[128,128], index: 5, kind: input, shape index: {}]
  %s6 = inlined_call_operand.vmem [shape: f32[1,128], index: 6, kind: input, shape index: {}]
  %s7 = inlined_call_operand.hbm [shape: f32[8,128], index: 7, kind: output, shape index: {}]
  %s8 = sld [smem:[#allocation0]]
  $region58: #{tpu_custom_call.1} parent=0
    _
  %s10 = ssub.s32 1, %s8
  %s11 = scalar_select 0, %s10, %s8
  $region1: #{tpu_custom_call.1} parent=0
    #allocation2 [shape = 'u8[8192]{0}', space=vmem, size = 0x2000, scoped, tag = 'input window, operand 0, single buffered']
    #allocation3 [shape = 's32[1]{0}', space=sflag, size = 0x4, scoped, tag = 'scoped memory for tpu_custom_call.1']
    #allocation4 [shape = 's32[1]{0}', space=sflag, size = 0x4, scoped, tag = 'scoped memory for tpu_custom_call.1']
    #allocation5 [shape = 'u8[4096]{0}', space=vmem, size = 0x1000, scoped, tag = 'input window, operand 1, single buffered']
    #allocation6 [shape = 's32[1]{0}', space=sflag, size = 0x4, scoped, tag = 'scoped memory for tpu_custom_call.1']
    #allocation7 [shape = 'u8[49152]{0}', space=vmem, size = 0xc000, scoped, tag = 'input window, operand 2, single buffered']
    #allocation8 [shape = 'u8[6144]{0}', space=vmem, size = 0x1800, scoped, tag = 'input window, operand 3, single buffered']
    #allocation9 [shape = 's32[1]{0}', space=sflag, size = 0x4, scoped, tag = 'scoped memory for tpu_custom_call.1']
    #allocation10 [shape = 'u8[32768]{0}', space=vmem, size = 0x8000, scoped, tag = 'input window, operand 5, single buffered']
    #allocation11 [shape = 'u8[4096]{0}', space=vmem, size = 0x1000, scoped, tag = 'output window, operand 0, single buffered']
    %12 = vsyncpa [#allocation3], 0
    %13 = vsyncpa [#allocation6], 0
    %14 = vsyncpa [#allocation9], 0
    %15 = vsyncpa [#allocation4], 0
    // Predicated region
    $region2: #{tpu_custom_call.1} parent=1 // pred_check
      _
    $region3: #{tpu_custom_call.1} parent=1 // pred_check_branch
      %17 = sbr.rel (0) target = $region5
    $region4: #{tpu_custom_call.1} parent=1 // pred_region
      %s19 = ssub.s32 256, 256
      %20 = vsyncadd [#allocation3], %s19
      %s22 = sshll.u32 [#allocation2], 4
      %s23 = int_to_ptr.vmem [resolvable:$true] %s22
      %25 = dma.hbm_to_vmem [thread:$0]  %s0, 256, %s23, [#allocation3]
    $region5: #{tpu_custom_call.1} parent=1 // pred_fallthru
      _
    // Predicated region
    $region6: #{tpu_custom_call.1} parent=1 // pred_check
      _
    $region7: #{tpu_custom_call.1} parent=1 // pred_check_branch
      %27 = sbr.rel (0) target = $region9
    $region8: #{tpu_custom_call.1} parent=1 // pred_region
      %s29 = ssub.s32 128, 128
      %30 = vsyncadd [#allocation6], %s29
      %s32 = sshll.u32 [#allocation5], 4
      %s33 = int_to_ptr.vmem [resolvable:$true] %s32
      %35 = dma.hbm_to_vmem [thread:$0]  %s1, 128, %s33, [#allocation6]
    $region9: #{tpu_custom_call.1} parent=1 // pred_fallthru
      _
    // Predicated region
    $region10: #{tpu_custom_call.1} parent=1 // pred_check
      _
    $region11: #{tpu_custom_call.1} parent=1 // pred_check_branch
      %37 = sbr.rel (0) target = $region13
    $region12: #{tpu_custom_call.1} parent=1 // pred_region
      %s39 = ssub.s32 1536, 1536
      %40 = vsyncadd [#allocation6], %s39
      %s41 = sshll.u32 [#allocation7], 4
      %s42 = int_to_ptr.vmem [resolvable:$true] %s41
      %47 = dma.hbm_to_vmem [thread:$0]  %s2, 1536, %s42, [#allocation6], 64, 64, 4
    $region13: #{tpu_custom_call.1} parent=1 // pred_fallthru
      _
    // Predicated region
    $region14: #{tpu_custom_call.1} parent=1 // pred_check
      _
    $region15: #{tpu_custom_call.1} parent=1 // pred_check_branch
      %49 = sbr.rel (0) target = $region17
    $region16: #{tpu_custom_call.1} parent=1 // pred_region
      %s51 = ssub.s32 192, 192
      %52 = vsyncadd [#allocation9], %s51
      %s53 = sshll.u32 [#allocation8], 4
      %s54 = int_to_ptr.vmem [resolvable:$true] %s53
      %59 = dma.hbm_to_vmem [thread:$0]  %s3, 192, %s54, [#allocation9], 64, 64, 4
    $region17: #{tpu_custom_call.1} parent=1 // pred_fallthru
      _
    // Predicated region
    $region18: #{tpu_custom_call.1} parent=1 // pred_check
      _
    $region19: #{tpu_custom_call.1} parent=1 // pred_check_branch
      %61 = sbr.rel (0) target = $region21
    $region20: #{tpu_custom_call.1} parent=1 // pred_region
      _
    $region21: #{tpu_custom_call.1} parent=1 // pred_fallthru
      _
    // Predicated region
    $region22: #{tpu_custom_call.1} parent=1 // pred_check
      _
    $region23: #{tpu_custom_call.1} parent=1 // pred_check_branch
      %63 = sbr.rel (0) target = $region25
    $region24: #{tpu_custom_call.1} parent=1 // pred_region
      %s65 = ssub.s32 1024, 1024
      %66 = vsyncadd [#allocation9], %s65
      %s67 = sshll.u32 [#allocation10], 4
      %s68 = int_to_ptr.vmem [resolvable:$true] %s67
      %73 = dma.hbm_to_vmem [thread:$0]  %s5, 1024, %s68, [#allocation9], 64, 64, 4
    $region25: #{tpu_custom_call.1} parent=1 // pred_fallthru
      _
    // Predicated region
    $region26: #{tpu_custom_call.1} parent=1 // pred_check
      _
    $region27: #{tpu_custom_call.1} parent=1 // pred_check_branch
      %75 = sbr.rel (0) target = $region29
    $region28: #{tpu_custom_call.1} parent=1 // pred_region
      _
    $region29: #{tpu_custom_call.1} parent=1 // pred_fallthru
      _
    // Predicated region
    $region30: #{tpu_custom_call.1} parent=1 // pred_check
      _
    $region31: #{tpu_custom_call.1} parent=1 // pred_check_branch
      %77 = sbr.rel (0) target = $region33
    $region32: #{tpu_custom_call.1} parent=1 // pred_region
      %78 = dma.done [#allocation3], 256
    $region33: #{tpu_custom_call.1} parent=1 // pred_fallthru
      _
    // Predicated region
    $region34: #{tpu_custom_call.1} parent=1 // pred_check
      _
    $region35: #{tpu_custom_call.1} parent=1 // pred_check_branch
      %80 = sbr.rel (0) target = $region37
    $region36: #{tpu_custom_call.1} parent=1 // pred_region
      %81 = dma.done [#allocation6], 128
    $region37: #{tpu_custom_call.1} parent=1 // pred_fallthru
      _
    // Predicated region
    $region38: #{tpu_custom_call.1} parent=1 // pred_check
      _
    $region39: #{tpu_custom_call.1} parent=1 // pred_check_branch
      %83 = sbr.rel (0) target = $region41
    $region40: #{tpu_custom_call.1} parent=1 // pred_region
      %84 = dma.done [#allocation6], 1536
    $region41: #{tpu_custom_call.1} parent=1 // pred_fallthru
      _
    // Predicated region
    $region42: #{tpu_custom_call.1} parent=1 // pred_check
      _
    $region43: #{tpu_custom_call.1} parent=1 // pred_check_branch
      %86 = sbr.rel (0) target = $region45
    $region44: #{tpu_custom_call.1} parent=1 // pred_region
      %87 = dma.done [#allocation9], 192
    $region45: #{tpu_custom_call.1} parent=1 // pred_fallthru
      _
    // Predicated region
    $region46: #{tpu_custom_call.1} parent=1 // pred_check
      _
    $region47: #{tpu_custom_call.1} parent=1 // pred_check_branch
      %89 = sbr.rel (0) target = $region49
    $region48: #{tpu_custom_call.1} parent=1 // pred_region
      %90 = dma.done [#allocation9], 1024
    $region49: #{tpu_custom_call.1} parent=1 // pred_fallthru
      _
    %v92 = vld [vmem:[#allocation2] sm:$0xff]
    %v93 = vld [vmem:[#allocation2 + $0x8] sm:$0xff]
    %v94 = vpack.c.bf16 %v92, %v92
    %v95 = vpack.c.bf16 %v93, %v93
    %v96 = vld [vmem:[#allocation7] sm:$0xf]
    %v97 = vld [vmem:[#allocation7 + $0x4] sm:$0xf]
    %v98 = vld [vmem:[#allocation7 + $0x8] sm:$0xf]
    %v99 = vld [vmem:[#allocation7 + $0xc] sm:$0xf]
    %v100 = vld [vmem:[#allocation7 + $0x10] sm:$0xf]
    %v101 = vld [vmem:[#allocation7 + $0x14] sm:$0xf]
    %v102 = vld [vmem:[#allocation7 + $0x18] sm:$0xf]
    %v103 = vld [vmem:[#allocation7 + $0x1c] sm:$0xf]
    %v104 = vld [vmem:[#allocation7 + $0x20] sm:$0xf]
    %v105 = vld [vmem:[#allocation7 + $0x24] sm:$0xf]
    %v106 = vld [vmem:[#allocation7 + $0x28] sm:$0xf]
    %v107 = vld [vmem:[#allocation7 + $0x2c] sm:$0xf]
    %v108 = vld [vmem:[#allocation7 + $0x30] sm:$0xf]
    %v109 = vld [vmem:[#allocation7 + $0x34] sm:$0xf]
    %v110 = vld [vmem:[#allocation7 + $0x38] sm:$0xf]
    %v111 = vld [vmem:[#allocation7 + $0x3c] sm:$0xf]
    %v112 = vld [vmem:[#allocation7 + $0x40] sm:$0xf]
    %v113 = vld [vmem:[#allocation7 + $0x44] sm:$0xf]
    %v114 = vld [vmem:[#allocation7 + $0x48] sm:$0xf]
    %v115 = vld [vmem:[#allocation7 + $0x4c] sm:$0xf]
    %v116 = vld [vmem:[#allocation7 + $0x50] sm:$0xf]
    %v117 = vld [vmem:[#allocation7 + $0x54] sm:$0xf]
    %v118 = vld [vmem:[#allocation7 + $0x58] sm:$0xf]
    %v119 = vld [vmem:[#allocation7 + $0x5c] sm:$0xf]
    %v120 = vld [vmem:[#allocation5] sm:$0xff]
    %v121 = vpack.c.bf16 %v120, %v120
    %v122 = vld [vmem:[#allocation8] sm:$0xf]
    %v123 = vld [vmem:[#allocation8 + $0x4] sm:$0xf]
    %v124 = vld [vmem:[#allocation8 + $0x8] sm:$0xf]
    %v128 = vunpack.c.l.b16 %v122
    %v129 = vunpack.c.l.b16 %v123
    %v130 = vunpack.c.l.b16 %v124
    %v131 = vpack.c.b16 %v129, %v128
    %v132 = vpack.c.b16 %v130, %v130
    %vm134 = vcmask 195584
    %v136 = vsel %vm134, %v121, 0
    %vm138 = vcmask 1043456
    %v140 = vsel %vm138, %v132, 0
    %142 = vmatprep.subr.bf16.mxu0 0
    %143 = vmatpush1.bf16.msra.mxu0 %v131
    %144 = vmatprep.subr.bf16.mxu0 0
    %145 = vmatpush1.bf16.msra.mxu0 %v140
    %146 = vmatprep.subr.bf16.mxu0 0
    %147 = vmatpush1.bf16.msra.mxu0 0
    %148 = vmatprep.subr.bf16.mxu0 0
    %149 = vmatpush1.bf16.msra.mxu0 0
    %150 = vmatprep.subr.bf16.mxu0 0
    %151 = vmatpush1.bf16.msra.mxu0 0
    %152 = vmatprep.subr.bf16.mxu0 0
    %153 = vmatpush1.bf16.msra.mxu0 0
    %154 = vmatprep.subr.bf16.mxu0 0
    %155 = vmatpush1.bf16.msra.mxu0 0
    %156 = vmatprep.subr.bf16.mxu0 0
    %157 = vmatpush1.bf16.msra.mxu0 0
    %158 = vmatprep.subr.bf16.mxu0 0
    %159 = vmatpush1.bf16.msra.mxu0 0
    %160 = vmatprep.subr.bf16.mxu0 0
    %161 = vmatpush1.bf16.msra.mxu0 0
    %162 = vmatprep.subr.bf16.mxu0 0
    %163 = vmatpush1.bf16.msra.mxu0 0
    %164 = vmatprep.subr.bf16.mxu0 0
    %165 = vmatpush1.bf16.msra.mxu0 0
    %166 = vmatprep.subr.bf16.mxu0 0
    %167 = vmatpush1.bf16.msra.mxu0 0
    %168 = vmatprep.subr.bf16.mxu0 0
    %169 = vmatpush1.bf16.msra.mxu0 0
    %170 = vmatprep.subr.bf16.mxu0 0
    %171 = vmatpush1.bf16.msra.mxu0 0
    %172 = vmatprep.subr.bf16.mxu0 0
    %173 = vmatpush1.bf16.msra.mxu0 0
    %174 = vmatprep.mubr.bf16.mxu0 0
    %175 = vmatmul.mubr.bf16.gmra.mrb[0].mxu0 %v136
    %v176 = vpop.f32.mrb[0].mxu0
    %v177 = vadd.f32 0.0, %v176
    %v178 = vpop.f32.mrb[0].mxu0
    %v179 = vpop.f32.mrb[0].mxu0
    %v180 = vpop.f32.mrb[0].mxu0
    %181 = vdwg.mxu0
    %v206 = vunpack.c.l.b16 %v96
    %v207 = vunpack.c.l.b16 %v97
    %v208 = vunpack.c.l.b16 %v98
    %v209 = vunpack.c.l.b16 %v99
    %v210 = vunpack.c.l.b16 %v100
    %v211 = vunpack.c.l.b16 %v101
    %v212 = vunpack.c.l.b16 %v102
    %v213 = vunpack.c.l.b16 %v103
    %v214 = vunpack.c.l.b16 %v104
    %v215 = vunpack.c.l.b16 %v105
    %v216 = vunpack.c.l.b16 %v106
    %v217 = vunpack.c.l.b16 %v107
    %v218 = vunpack.c.l.b16 %v108
    %v219 = vunpack.c.l.b16 %v109
    %v220 = vunpack.c.l.b16 %v110
    %v221 = vunpack.c.l.b16 %v111
    %v222 = vunpack.c.l.b16 %v112
    %v223 = vunpack.c.l.b16 %v113
    %v224 = vunpack.c.l.b16 %v114
    %v225 = vunpack.c.l.b16 %v115
    %v226 = vunpack.c.l.b16 %v116
    %v227 = vunpack.c.l.b16 %v117
    %v228 = vunpack.c.l.b16 %v118
    %v229 = vunpack.c.l.b16 %v119
    %v230 = vpack.c.b16 %v207, %v206
    %v231 = vpack.c.b16 %v209, %v208
    %v232 = vpack.c.b16 %v211, %v210
    %v233 = vpack.c.b16 %v213, %v212
    %v234 = vpack.c.b16 %v215, %v214
    %v235 = vpack.c.b16 %v217, %v216
    %v236 = vpack.c.b16 %v219, %v218
    %v237 = vpack.c.b16 %v221, %v220
    %v238 = vpack.c.b16 %v223, %v222
    %v239 = vpack.c.b16 %v225, %v224
    %v240 = vpack.c.b16 %v227, %v226
    %v241 = vpack.c.b16 %v229, %v228
    %vm254 = vcmask 523264
    %v256 = vsel %vm254, %v95, 0
    %258 = vmatprep.subr.bf16.mxu0 0
    %259 = vmatpush1.bf16.msra.mxu0 %v230
    %260 = vmatprep.subr.bf16.mxu0 0
    %261 = vmatpush1.bf16.msra.mxu0 %v231
    %262 = vmatprep.subr.bf16.mxu0 0
    %263 = vmatpush1.bf16.msra.mxu0 %v232
    %264 = vmatprep.subr.bf16.mxu0 0
    %265 = vmatpush1.bf16.msra.mxu0 %v233
    %266 = vmatprep.subr.bf16.mxu0 0
    %267 = vmatpush1.bf16.msra.mxu0 %v234
    %268 = vmatprep.subr.bf16.mxu0 0
    %269 = vmatpush1.bf16.msra.mxu0 %v235
    %270 = vmatprep.subr.bf16.mxu0 0
    %271 = vmatpush1.bf16.msra.mxu0 %v236
    %272 = vmatprep.subr.bf16.mxu0 0
    %273 = vmatpush1.bf16.msra.mxu0 %v237
    %274 = vmatprep.subr.bf16.mxu0 0
    %275 = vmatpush1.bf16.msra.mxu0 %v238
    %276 = vmatprep.subr.bf16.mxu0 0
    %277 = vmatpush1.bf16.msra.mxu0 %v239
    %278 = vmatprep.subr.bf16.mxu0 0
    %279 = vmatpush1.bf16.msra.mxu0 %v240
    %280 = vmatprep.subr.bf16.mxu0 0
    %281 = vmatpush1.bf16.msra.mxu0 %v241
    %282 = vmatprep.subr.bf16.mxu0 0
    %283 = vmatpush1.bf16.msra.mxu0 0
    %284 = vmatprep.subr.bf16.mxu0 0
    %285 = vmatpush1.bf16.msra.mxu0 0
    %286 = vmatprep.subr.bf16.mxu0 0
    %287 = vmatpush1.bf16.msra.mxu0 0
    %288 = vmatprep.subr.bf16.mxu0 0
    %289 = vmatpush1.bf16.msra.mxu0 0
    %290 = vmatprep.mubr.bf16.mxu0 %v256
    %291 = vmatmul.mubr.bf16.gmra.mrb[0].mxu0 %v94
    %v292 = vpop.f32.mrb[0].mxu0
    %v293 = vadd.f32 %v177, %v292
    %v294 = vpop.f32.mrb[0].mxu0
    %v295 = vpop.f32.mrb[0].mxu0
    %v296 = vpop.f32.mrb[0].mxu0
    %297 = vdwg.mxu0
    %v298 = vld [vmem:[%s4] sm:$0x1]
    %v299 = vlaneseq
    %v300 = vshrl.u32 %v299, 7
    %v301 = vsub.s32 0, %v300
    %v302 = vrot.slane %v298, %v301
    %v303 = vadd.f32 %v293, %v302
    %v304 = vmax.f32 %v303, 0.0
    %305 = vadd.xlane.f32.xlu0 %v304
    %v306 = vpop.xlane.xlu0 %305
    %v307 = vrcp.pop 128.0
    %v308 = vmul.f32 %v306, %v307
    %v309 = vsub.f32 %v304, %v308
    %v310 = vmul.f32 %v309, %v309
    %311 = vadd.xlane.f32.xlu0 %v310
    %v312 = vpop.xlane.xlu0 %311
    %v313 = vmul.f32 %v312, %v307
    %v314 = vadd.f32 %v313, 1e-05
    %v315 = vrsqrt.pop %v314
    %v316 = vmul.f32 %v309, %v315
    %v317 = vld [vmem:[%s4 + $0x1] sm:$0x1]
    %v318 = vlaneseq
    %v319 = vshrl.u32 %v318, 7
    %v320 = vsub.s32 0, %v319
    %v321 = vrot.slane %v317, %v320
    %v322 = vmul.f32 %v316, %v321
    %v323 = vld [vmem:[%s4 + $0x2] sm:$0x1]
    %v324 = vlaneseq
    %v325 = vshrl.u32 %v324, 7
    %v326 = vsub.s32 0, %v325
    %v327 = vrot.slane %v323, %v326
    %v328 = vadd.f32 %v322, %v327
    %v329 = vpack.c.bf16 %v328, %v328
    %v330 = vld [vmem:[#allocation10] sm:$0xf]
    %v331 = vld [vmem:[#allocation10 + $0x4] sm:$0xf]
    %v332 = vld [vmem:[#allocation10 + $0x8] sm:$0xf]
    %v333 = vld [vmem:[#allocation10 + $0xc] sm:$0xf]
    %v334 = vld [vmem:[#allocation10 + $0x10] sm:$0xf]
    %v335 = vld [vmem:[#allocation10 + $0x14] sm:$0xf]
    %v336 = vld [vmem:[#allocation10 + $0x18] sm:$0xf]
    %v337 = vld [vmem:[#allocation10 + $0x1c] sm:$0xf]
    %v338 = vld [vmem:[#allocation10 + $0x20] sm:$0xf]
    %v339 = vld [vmem:[#allocation10 + $0x24] sm:$0xf]
    %v340 = vld [vmem:[#allocation10 + $0x28] sm:$0xf]
    %v341 = vld [vmem:[#allocation10 + $0x2c] sm:$0xf]
    %v342 = vld [vmem:[#allocation10 + $0x30] sm:$0xf]
    %v343 = vld [vmem:[#allocation10 + $0x34] sm:$0xf]
    %v344 = vld [vmem:[#allocation10 + $0x38] sm:$0xf]
    %v345 = vld [vmem:[#allocation10 + $0x3c] sm:$0xf]
    %v346 = vld [vmem:[%s6] sm:$0x1]
    %v348 = vlaneseq
    %v349 = vshrl.u32 %v348, 7
    %v350 = vsub.s32 0, %v349
    %v351 = vrot.slane %v346, %v350
    %v369 = vunpack.c.l.b16 %v330
    %v370 = vunpack.c.l.b16 %v331
    %v371 = vunpack.c.l.b16 %v332
    %v372 = vunpack.c.l.b16 %v333
    %v373 = vunpack.c.l.b16 %v334
    %v374 = vunpack.c.l.b16 %v335
    %v375 = vunpack.c.l.b16 %v336
    %v376 = vunpack.c.l.b16 %v337
    %v377 = vunpack.c.l.b16 %v338
    %v378 = vunpack.c.l.b16 %v339
    %v379 = vunpack.c.l.b16 %v340
    %v380 = vunpack.c.l.b16 %v341
    %v381 = vunpack.c.l.b16 %v342
    %v382 = vunpack.c.l.b16 %v343
    %v383 = vunpack.c.l.b16 %v344
    %v384 = vunpack.c.l.b16 %v345
    %v385 = vpack.c.b16 %v370, %v369
    %v386 = vpack.c.b16 %v372, %v371
    %v387 = vpack.c.b16 %v374, %v373
    %v388 = vpack.c.b16 %v376, %v375
    %v389 = vpack.c.b16 %v378, %v377
    %v390 = vpack.c.b16 %v380, %v379
    %v391 = vpack.c.b16 %v382, %v381
    %v392 = vpack.c.b16 %v384, %v383
    %401 = vmatprep.subr.bf16.mxu0 0
    %402 = vmatpush1.bf16.msra.mxu0 %v385
    %403 = vmatprep.subr.bf16.mxu0 0
    %404 = vmatpush1.bf16.msra.mxu0 %v386
    %405 = vmatprep.subr.bf16.mxu0 0
    %406 = vmatpush1.bf16.msra.mxu0 %v387
    %407 = vmatprep.subr.bf16.mxu0 0
    %408 = vmatpush1.bf16.msra.mxu0 %v388
    %409 = vmatprep.subr.bf16.mxu0 0
    %410 = vmatpush1.bf16.msra.mxu0 %v389
    %411 = vmatprep.subr.bf16.mxu0 0
    %412 = vmatpush1.bf16.msra.mxu0 %v390
    %413 = vmatprep.subr.bf16.mxu0 0
    %414 = vmatpush1.bf16.msra.mxu0 %v391
    %415 = vmatprep.subr.bf16.mxu0 0
    %416 = vmatpush1.bf16.msra.mxu0 %v392
    %417 = vmatprep.subr.bf16.mxu0 0
    %418 = vmatpush1.bf16.msra.mxu0 0
    %419 = vmatprep.subr.bf16.mxu0 0
    %420 = vmatpush1.bf16.msra.mxu0 0
    %421 = vmatprep.subr.bf16.mxu0 0
    %422 = vmatpush1.bf16.msra.mxu0 0
    %423 = vmatprep.subr.bf16.mxu0 0
    %424 = vmatpush1.bf16.msra.mxu0 0
    %425 = vmatprep.subr.bf16.mxu0 0
    %426 = vmatpush1.bf16.msra.mxu0 0
    %427 = vmatprep.subr.bf16.mxu0 0
    %428 = vmatpush1.bf16.msra.mxu0 0
    %429 = vmatprep.subr.bf16.mxu0 0
    %430 = vmatpush1.bf16.msra.mxu0 0
    %431 = vmatprep.subr.bf16.mxu0 0
    %432 = vmatpush1.bf16.msra.mxu0 0
    %433 = vmatprep.mubr.bf16.mxu0 0
    %434 = vmatmul.mubr.bf16.gmra.mrb[0].mxu0 %v329
    %v435 = vpop.f32.mrb[0].mxu0
    %v436 = vadd.f32 %v351, %v435
    %v437 = vpop.f32.mrb[0].mxu0
    %v438 = vpop.f32.mrb[0].mxu0
    %v439 = vpop.f32.mrb[0].mxu0
    %440 = vdwg.mxu0
    %441 = vst [vmem:[#allocation11] sm:$0xff] %v436
    // Predicated region
    $region50: #{tpu_custom_call.1} parent=1 // pred_check
      _
    $region51: #{tpu_custom_call.1} parent=1 // pred_check_branch
      %443 = sbr.rel (0) target = $region53
    $region52: #{tpu_custom_call.1} parent=1 // pred_region
      %s445 = ssub.s32 128, 128
      %446 = vsyncadd [#allocation4], %s445
      %s448 = sshll.u32 [#allocation11], 4
      %s449 = int_to_ptr.vmem [resolvable:$true] %s448
      %451 = dma.vmem_to_hbm [thread:$0]  %s449, 128, %s7, [#allocation4]
    $region53: #{tpu_custom_call.1} parent=1 // pred_fallthru
      _
    // Predicated region
    $region54: #{tpu_custom_call.1} parent=1 // pred_check
      _
    $region55: #{tpu_custom_call.1} parent=1 // pred_check_branch
      %453 = sbr.rel (0) target = $region57
    $region56: #{tpu_custom_call.1} parent=1 // pred_region
      %454 = dma.done [#allocation4], 128
    $region57: #{tpu_custom_call.1} parent=1 // pred_fallthru
      _
    %455 = vsyncpa [#allocation3], 1
    %456 = vsyncpa [#allocation6], 1
    %457 = vsyncpa [#allocation9], 1
    %458 = vsyncpa [#allocation4], 1

</llo_original>
